<compile_context>
chip_gen: v6e
topology: v6e:2x2x1
jax: 0.10.0
libtpu: 0.0.40
codegen_flags: <defaults>
</compile_context>

<pallas_src>
import jax
import jax.numpy as jnp
from jax.experimental import pallas as pl
from jax.experimental.pallas import tpu as pltpu


LANE = 128
SUBLANE = 8


def _round_up(x, m):
    return (x + m - 1) // m * m


# ----------------------------- Pallas kernels -----------------------------

def xw_kernel(x_ref, w_ref, o_ref):
    # One fused MXU matmul: X-row-block @ [W_gcn | W_lin]  (lane-dense output).
    o_ref[...] = jnp.dot(
        x_ref[...], w_ref[...], preferred_element_type=jnp.float32
    ).astype(o_ref.dtype)


def agg_lin_kernel(a_ref, xwg_ref, lin_ref, b_ref, o_ref):
    # out rows = A-row-block @ XW_gcn (resident) + (X @ W_lin) rows + (b_gcn+b_lin)
    agg = jnp.dot(a_ref[...], xwg_ref[...], preferred_element_type=jnp.float32)
    o_ref[...] = (agg + lin_ref[...].astype(jnp.float32)
                  + b_ref[...]).astype(o_ref.dtype)


def agg_kernel(a_ref, xwg_ref, b_ref, o_ref):
    # with_linear=False variant: no linear-branch input at all.
    agg = jnp.dot(a_ref[...], xwg_ref[...], preferred_element_type=jnp.float32)
    o_ref[...] = (agg + b_ref[...]).astype(o_ref.dtype)


# ------------------------------ wrappers ----------------------------------

def naop_pallas(a_norm, x, w_gcn, b_gcn, w_lin=None, b_lin=None,
                *, with_linear=True, compute_dtype=jnp.float32):
    """Fused NaOp forward.  compute_dtype=jnp.bfloat16 halves HBM/VMEM traffic
    on v6e/v7x (accumulation stays f32)."""
    n, in_dim = x.shape
    out_dim = w_gcn.shape[1]

    in_p = _round_up(in_dim, LANE)
    out_p = _round_up(out_dim, LANE)
    # Row tile: 128 at realistic sizes (lane-sized A columns on the MXU),
    # 8 (one sublane group) for tiny demo graphs so the grid still has >1 step.
    tm = LANE if n >= LANE else SUBLANE
    n_p = _round_up(n, tm)

    cd = jnp.dtype(compute_dtype)

    # Zero-pad + cast inputs.  Padded rows/cols only contribute zeros and are
    # sliced off at the end, so the math is unchanged.
    x_p = jnp.zeros((n_p, in_p), cd).at[:n, :in_dim].set(x.astype(cd))
    a_p = jnp.zeros((n_p, n_p), cd).at[:n, :n].set(a_norm.astype(cd))

    if with_linear:
        cat = 2 * out_p
        w_cat = jnp.zeros((in_p, cat), cd)
        w_cat = w_cat.at[:in_dim, :out_dim].set(w_gcn.astype(cd))
        w_cat = w_cat.at[:in_dim, out_p:out_p + out_dim].set(w_lin.astype(cd))
        bias = jnp.zeros((1, out_p), jnp.float32).at[:, :out_dim].set(
            (b_gcn + b_lin).reshape(1, out_dim).astype(jnp.float32))
    else:
        cat = out_p
        w_cat = jnp.zeros((in_p, cat), cd).at[:in_dim, :out_dim].set(
            w_gcn.astype(cd))
        bias = jnp.zeros((1, out_p), jnp.float32).at[:, :out_dim].set(
            jnp.asarray(b_gcn).reshape(1, out_dim).astype(jnp.float32))

    grid = (n_p // tm,)
    itemsize = cd.itemsize

    # ---- pass 1: XW_cat = X @ [W_gcn | W_lin]  (single fused matmul) ------
    xw_cost = pl.CostEstimate(
        flops=2 * n_p * in_p * cat,
        transcendentals=0,
        bytes_accessed=(x_p.size + w_cat.size + n_p * cat) * itemsize)
    xw = pl.pallas_call(
        xw_kernel,
        out_shape=jax.ShapeDtypeStruct((n_p, cat), cd),
        grid_spec=pl.GridSpec(
            grid=grid,
            in_specs=[
                pl.BlockSpec((tm, in_p), lambda i: (i, 0)),   # X row block
                pl.BlockSpec((in_p, cat), lambda i: (0, 0)),  # W_cat resident
            ],
            out_specs=pl.BlockSpec((tm, cat), lambda i: (i, 0)),
        ),
        compiler_params=pltpu.CompilerParams(
            dimension_semantics=("parallel",)),
        cost_estimate=xw_cost,
    )(x_p, w_cat)

    # ---- pass 2: out = A @ XW_gcn (+ X @ W_lin) + bias --------------------
    agg_cost = pl.CostEstimate(
        flops=2 * n_p * n_p * out_p,
        transcendentals=0,
        bytes_accessed=(a_p.size + xw.size) * itemsize
        + (bias.size + n_p * out_p) * 4)

    if with_linear:
        out_p_arr = pl.pallas_call(
            agg_lin_kernel,
            out_shape=jax.ShapeDtypeStruct((n_p, out_p), jnp.float32),
            grid_spec=pl.GridSpec(
                grid=grid,
                in_specs=[
                    # A row block, streamed & double-buffered by the pipeline.
                    pl.BlockSpec((tm, n_p), lambda i: (i, 0)),
                    # GCN half of XW: same block every step -> VMEM-resident.
                    pl.BlockSpec((n_p, out_p), lambda i: (0, 0)),
                    # Linear half of XW: row block i, column-block 1.
                    pl.BlockSpec((tm, out_p), lambda i: (i, 1)),
                    # Pre-summed bias (b_gcn + b_lin), resident.
                    pl.BlockSpec((1, out_p), lambda i: (0, 0)),
                ],
                out_specs=pl.BlockSpec((tm, out_p), lambda i: (i, 0)),
            ),
            compiler_params=pltpu.CompilerParams(
                dimension_semantics=("parallel",)),
            cost_estimate=agg_cost,
        )(a_p, xw, xw, bias)
    else:
        out_p_arr = pl.pallas_call(
            agg_kernel,
            out_shape=jax.ShapeDtypeStruct((n_p, out_p), jnp.float32),
            grid_spec=pl.GridSpec(
                grid=grid,
                in_specs=[
                    pl.BlockSpec((tm, n_p), lambda i: (i, 0)),
                    pl.BlockSpec((n_p, out_p), lambda i: (0, 0)),
                    pl.BlockSpec((1, out_p), lambda i: (0, 0)),
                ],
                out_specs=pl.BlockSpec((tm, out_p), lambda i: (i, 0)),
            ),
            compiler_params=pltpu.CompilerParams(
                dimension_semantics=("parallel",)),
            cost_estimate=agg_cost,
        )(a_p, xw, bias)

    return out_p_arr[:n, :out_dim]


# ------------------------------ JAX glue ----------------------------------

def build_gcn_norm_adj(edge_index, num_nodes):
    """Dense symmetric-normalized adjacency with self-loops (GCNConv norm)."""
    src, dst = edge_index[0], edge_index[1]
    loops = jnp.arange(num_nodes, dtype=edge_index.dtype)
    src = jnp.concatenate([src, loops])
    dst = jnp.concatenate([dst, loops])
    adj = jnp.zeros((num_nodes, num_nodes), jnp.float32)
    # message flows src -> dst: out[dst] += norm * x[src]
    adj = adj.at[dst, src].add(1.0)
    deg = adj.sum(axis=1)
    dinv_sqrt = jnp.where(deg > 0, 1.0 / jnp.sqrt(deg), 0.0)
    return dinv_sqrt[:, None] * adj * dinv_sqrt[None, :]


def naop_forward(x, edge_index, params, with_linear=True,
                 compute_dtype=jnp.float32):
    n = x.shape[0]
    a_norm = build_gcn_norm_adj(edge_index, n)
    return naop_pallas(
        a_norm, x,
        params["w_gcn"], params["b_gcn"],
        params["w_lin"], params["b_lin"],
        with_linear=with_linear, compute_dtype=compute_dtype)


def init_params(key, in_dim, out_dim):
    k1, k2, k3 = jax.random.split(key, 3)
    scale_g = jnp.sqrt(6.0 / (in_dim + out_dim))
    w_gcn = jax.random.uniform(k1, (in_dim, out_dim), jnp.float32,
                               -scale_g, scale_g)
    b_gcn = jnp.zeros((1, out_dim), jnp.float32)
    bound = 1.0 / jnp.sqrt(jnp.float32(in_dim))
    w_lin = jax.random.uniform(k2, (in_dim, out_dim), jnp.float32,
                               -bound, bound)
    b_lin = jax.random.uniform(k3, (1, out_dim), jnp.float32, -bound, bound)
    return {"w_gcn": w_gcn, "b_gcn": b_gcn, "w_lin": w_lin, "b_lin": b_lin}


# -------------------------------- main -------------------------------------

if __name__ == "__main__":
    key = jax.random.PRNGKey(0)
    kx, ke, kp = jax.random.split(key, 3)

    num_nodes, in_dim, out_dim, num_edges = 16, 32, 32, 40

    x = jax.random.normal(kx, (num_nodes, in_dim), jnp.float32)
    edge_index = jax.random.randint(ke, (2, num_edges), 0, num_nodes,
                                    dtype=jnp.int32)
    params = init_params(kp, in_dim, out_dim)
    a_norm = build_gcn_norm_adj(edge_index, num_nodes)

    # with_linear=True path
    out = jax.block_until_ready(
        naop_forward(x, edge_index, params, with_linear=True))
    ref = (a_norm @ (x @ params["w_gcn"]) + params["b_gcn"]
           + x @ params["w_lin"] + params["b_lin"])
    assert out.shape == (num_nodes, out_dim)
    assert jnp.allclose(out, ref, atol=1e-4, rtol=1e-4)

    # with_linear=False path (static variant, no zeroed-weight matmul)
    out_nl = jax.block_until_ready(
        naop_forward(x, edge_index, params, with_linear=False))
    ref_nl = a_norm @ (x @ params["w_gcn"]) + params["b_gcn"]
    assert jnp.allclose(out_nl, ref_nl, atol=1e-4, rtol=1e-4)

    print("KERNEL_OK")
</pallas_src>

<mosaic_0001>
module attributes {stable_mosaic.version = 11 : i64} {
  func.func @xw_kernel(%arg0: i32, %arg1: memref<8x128xf32, #tpu.memory_space<vmem>>, %arg2: memref<128x256xf32, #tpu.memory_space<vmem>>, %arg3: memref<8x256xf32, #tpu.memory_space<vmem>>) attributes {dimension_semantics = [#tpu.dimension_semantics<parallel>], iteration_bounds = array<i64: 2>, scalar_prefetch = 0 : i64, scratch_operands = 0 : i64, tpu.core_type = #tpu.core_type<tc>, window_params = [{transform_indices = @transform_0, window_bounds = array<i64: 8, 128>}, {pipeline_mode = #tpu.pipeline_mode<synchronous>, transform_indices = @transform_1, window_bounds = array<i64: 128, 256>}, {transform_indices = @transform_2, window_bounds = array<i64: 8, 256>}]} {
    %c0 = arith.constant 0 : index
    %c0_0 = arith.constant 0 : index
    %0 = vector.load %arg1[%c0, %c0_0] : memref<8x128xf32, #tpu.memory_space<vmem>>, vector<8x128xf32>
    %c0_1 = arith.constant 0 : index
    %c0_2 = arith.constant 0 : index
    %1 = vector.load %arg2[%c0_1, %c0_2] : memref<128x256xf32, #tpu.memory_space<vmem>>, vector<128x256xf32>
    %cst = arith.constant dense<0.000000e+00> : vector<8x256xf32>
    %2 = tpu.matmul %0, %1, %cst {dimension_numbers = #tpu.dot_dimension_numbers<[1], [0], [0], [1], [0, 0, 1, 1], [], []>} : vector<8x128xf32>, vector<128x256xf32>, vector<8x256xf32> -> vector<8x256xf32>
    %c0_3 = arith.constant 0 : index
    %c0_4 = arith.constant 0 : index
    %3 = vector.load %arg3[%c0_3, %c0_4] : memref<8x256xf32, #tpu.memory_space<vmem>>, vector<8x256xf32>
    tpu.vector_store %arg3[%c0_3, %c0_4], %2 {strides = array<i32>} : memref<8x256xf32, #tpu.memory_space<vmem>>, vector<8x256xf32>,
    return
  }
  func.func @transform_0(%arg0: i32) -> (i32, i32) {
    %c0_i32 = arith.constant 0 : i32
    %c0_i32_0 = arith.constant 0 : i32
    return %arg0, %c0_i32 : i32, i32
  }
  func.func @transform_1(%arg0: i32) -> (i32, i32) {
    %c0_i32 = arith.constant 0 : i32
    %c0_i32_0 = arith.constant 0 : i32
    %c0_i32_1 = arith.constant 0 : i32
    return %c0_i32, %c0_i32_0 : i32, i32
  }
  func.func @transform_2(%arg0: i32) -> (i32, i32) {
    %c0_i32 = arith.constant 0 : i32
    %c0_i32_0 = arith.constant 0 : i32
    return %arg0, %c0_i32 : i32, i32
  }
}

</mosaic_0001>

<llo_original>
// kernel: tpu_custom_call.1
$region0: #{tpu_custom_call.1}
  #allocation0 [shape = 'u32[]', space=smem, size = 0x4, offset = 0x4, fixed_abs, tag = 'smem constant byte address 0x4 - core index']
  #allocation1 [shape = 'u32[144,128]{1,0:T(1,128)}', space=vmem, size = 0x12000, scoped, tag = 'internal scratch']
  %s0 = inlined_call_operand.hbm [shape: f32[16,128], index: 0, kind: input, shape index: {}]
  %s1 = inlined_call_operand.hbm [shape: f32[128,256], index: 1, kind: input, shape index: {}]
  %s2 = inlined_call_operand.hbm [shape: f32[16,256], index: 2, kind: output, shape index: {}]
  %s3 = sld [smem:[#allocation0]]
  $region49: #{tpu_custom_call.1} parent=0
    _
  %s5 = ssub.s32 1, %s3
  %s6 = scalar_select 0, %s5, %s3
  $region1: #{tpu_custom_call.1} parent=0
    #allocation2 [shape = 'u8[8192]{0}', space=vmem, size = 0x2000, scoped, tag = 'input window, operand 0']
    #allocation3 [shape = 's32[2]{0}', space=sflag, size = 0x8, scoped, tag = 'scoped memory for tpu_custom_call.1']
    #allocation4 [shape = 's32[2]{0}', space=sflag, size = 0x8, scoped, tag = 'scoped memory for tpu_custom_call.1']
    #allocation5 [shape = 'u8[131072]{0}', space=vmem, size = 0x20000, scoped, tag = 'input window, operand 1, single buffered']
    #allocation6 [shape = 's32[1]{0}', space=sflag, size = 0x4, scoped, tag = 'scoped memory for tpu_custom_call.1']
    #allocation7 [shape = 'u8[16384]{0}', space=vmem, size = 0x4000, scoped, tag = 'output window, operand 0']
    %7 = vsyncpa [#allocation3], 0
    %s8 = scalar_lea.sflag [#allocation3], 1
    %9 = vsyncpa %s8, 0
    %10 = vsyncpa [#allocation6], 0
    %11 = vsyncpa [#allocation4], 0
    %s12 = scalar_lea.sflag [#allocation4], 1
    %13 = vsyncpa %s12, 0
    loop: start=0, step=1, limit=4
    $region2: #{tpu_custom_call.1} parent=1 // loop_pre_header
      _
    $region3: #{tpu_custom_call.1} parent=1 // loop_header
      %s15 = sphi 0, %s19
      %p16 = scmp.ge.s32.totalorder %s15, 4
      %s25 = sphi 0, %s27
      %s28 = sphi 0, %s25
      %s29 = sphi 0, %s28
      %s45 = sphi 0, %s29
      %s49 = sphi 0, %s49
      %s51 = sphi 0, %s49
      %s52 = sphi 0, %s51
      %s66 = sphi 0, %s52
      %s72 = sphi 0, %s74
      %s75 = sphi 0, %s72
      %s76 = sphi 0, %s75
      %s92 = sphi 0, %s76
    $region4: #{tpu_custom_call.1} parent=1 // loop_header_branch
      %18 = sbr.rel (%p16) target = $region8
    $region5: #{tpu_custom_call.1} parent=1 // loop_body
      %s20 = ssub.s32 %s15, 1
      %s21 = ssub.s32 %s15, 2
      %s22 = sadd.s32 %s15, 1
      %s23 = ssub.s32 %s15, %s22
      %p24 = scmp.eq.s32.totalorder %s23, 0
      %s26 = sadd.s32 %s25, 1
      %s27 = scalar_select %p24, %s25, %s26
      %p30 = pneg %p24
      %p31 = scmp.eq.s32.totalorder %s15, 1
      %p32 = por %p30, %p31
      %p33 = scmp.ne.s32.totalorder %s25, %s28
      %p34 = scmp.eq.s32.totalorder %s15, 0
      %p35 = por %p33, %p34
      %p36 = scmp.ne.s32.totalorder %s25, %s28
      %p37 = scmp.eq.s32.totalorder %s20, 1
      %p38 = por %p36, %p37
      %p39 = scmp.ne.s32.totalorder %s28, %s29
      %p40 = scmp.eq.s32.totalorder %s20, 0
      %p41 = por %p39, %p40
      %p42 = scmp.ne.s32.totalorder %s28, %s29
      %p43 = scmp.eq.s32.totalorder %s21, 1
      %p44 = por %p42, %p43
      %p46 = scmp.ne.s32.totalorder %s29, %s45
      %p47 = scmp.eq.s32.totalorder %s21, 0
      %p48 = por %p46, %p47
      %s50 = sadd.s32 %s49, 1
      %p53 = scmp.eq.s32.totalorder %s15, 1
      %p54 = scmp.ne.s32.totalorder %s49, %s51
      %p55 = scmp.eq.s32.totalorder %s15, 0
      %p56 = por %p54, %p55
      %p57 = scmp.ne.s32.totalorder %s49, %s51
      %p58 = scmp.eq.s32.totalorder %s20, 1
      %p59 = por %p57, %p58
      %p60 = scmp.ne.s32.totalorder %s51, %s52
      %p61 = scmp.eq.s32.totalorder %s20, 0
      %p62 = por %p60, %p61
      %p63 = scmp.ne.s32.totalorder %s51, %s52
      %p64 = scmp.eq.s32.totalorder %s21, 1
      %p65 = por %p63, %p64
      %p67 = scmp.ne.s32.totalorder %s52, %s66
      %p68 = scmp.eq.s32.totalorder %s21, 0
      %p69 = por %p67, %p68
      %s70 = ssub.s32 %s15, %s22
      %p71 = scmp.eq.s32.totalorder %s70, 0
      %s73 = sadd.s32 %s72, 1
      %s74 = scalar_select %p71, %s72, %s73
      %p77 = pneg %p71
      %p78 = scmp.eq.s32.totalorder %s15, 1
      %p79 = por %p77, %p78
      %p80 = scmp.ne.s32.totalorder %s72, %s75
      %p81 = scmp.eq.s32.totalorder %s15, 0
      %p82 = por %p80, %p81
      %p83 = scmp.ne.s32.totalorder %s72, %s75
      %p84 = scmp.eq.s32.totalorder %s20, 1
      %p85 = por %p83, %p84
      %p86 = scmp.ne.s32.totalorder %s75, %s76
      %p87 = scmp.eq.s32.totalorder %s20, 0
      %p88 = por %p86, %p87
      %p89 = scmp.ne.s32.totalorder %s75, %s76
      %p90 = scmp.eq.s32.totalorder %s21, 1
      %p91 = por %p89, %p90
      %p93 = scmp.ne.s32.totalorder %s76, %s92
      %p94 = scmp.eq.s32.totalorder %s21, 0
      %p95 = por %p93, %p94
      %p96 = scmp.le.s32.totalorder 1, %s15
      %p97 = scmp.lt.s32.totalorder %s15, 3
      %p98 = pnand %p96, %p97
      %p99 = pneg %p98
      // Predicated region
      $region9: #{tpu_custom_call.1} parent=5 // pred_check
        _
      $region10: #{tpu_custom_call.1} parent=5 // pred_check_branch
        %101 = sbr.rel (%p98) target = $region12
      $region11: #{tpu_custom_call.1} parent=5 // pred_region
        %s102 = ssub.s32 %s15, 1
        // Predicated region
        $region13: #{tpu_custom_call.1} parent=11 // pred_check
          %p103 = pneg %p62
        $region14: #{tpu_custom_call.1} parent=11 // pred_check_branch
          %105 = sbr.rel (%p103) target = $region16
        $region15: #{tpu_custom_call.1} parent=11 // pred_region
          %s107 = ssub.s32 4096, 4096
          %108 = vsyncadd [#allocation6], %s107
          %s109 = sshll.u32 [#allocation5], 4
          %s110 = int_to_ptr.vmem [resolvable:$true] %s109
          %115 = dma.hbm_to_vmem [thread:$0]  %s1, 4096, %s110, [#allocation6], 256, 256, 16
        $region16: #{tpu_custom_call.1} parent=11 // pred_fallthru
          _
      $region12: #{tpu_custom_call.1} parent=5 // pred_fallthru
        _
      %p116 = scmp.lt.s32.totalorder %s15, 2
      // Predicated region
      $region17: #{tpu_custom_call.1} parent=5 // pred_check
        %p117 = pneg %p116
      $region18: #{tpu_custom_call.1} parent=5 // pred_check_branch
        %119 = sbr.rel (%p117) target = $region20
      $region19: #{tpu_custom_call.1} parent=5 // pred_region
        // Predicated region
        $region21: #{tpu_custom_call.1} parent=19 // pred_check
          %p120 = pneg %p35
        $region22: #{tpu_custom_call.1} parent=19 // pred_check_branch
          %122 = sbr.rel (%p120) target = $region24
        $region23: #{tpu_custom_call.1} parent=19 // pred_region
          %s123 = sand.u32 %s25, 1
          %s124 = scalar_lea.sflag [#allocation3], %s123
          %s125 = sand.u32 %s25, 1
          %s126 = smul.addr %s125, 8
          %s127 = scalar_lea.vmem [#allocation2], %s126
          %s129 = ssub.s32 128, 128
          %130 = vsyncadd %s124, %s129
          %s131 = smul.addr %s15, 128
          %s132 = scalar_lea.hbm %s0, %s131
          %s134 = sshll.u32 %s127, 4
          %s135 = int_to_ptr.vmem [resolvable:$true] %s134
          %137 = dma.hbm_to_vmem [thread:$0]  %s132, 128, %s135, %s124
        $region24: #{tpu_custom_call.1} parent=19 // pred_fallthru
          _
      $region20: #{tpu_custom_call.1} parent=5 // pred_fallthru
        _
      %p138 = scmp.le.s32.totalorder 1, %s15
      %p139 = scmp.lt.s32.totalorder %s15, 3
      %p140 = pnand %p138, %p139
      %p141 = pneg %p140
      // Predicated region
      $region25: #{tpu_custom_call.1} parent=5 // pred_check
        _
      $region26: #{tpu_custom_call.1} parent=5 // pred_check_branch
        %143 = sbr.rel (%p140) target = $region28
      $region27: #{tpu_custom_call.1} parent=5 // pred_region
        %s144 = ssub.s32 %s15, 1
        %s145 = sand.u32 %s28, 1
        %s146 = scalar_lea.sflag [#allocation3], %s145
        %s147 = sand.u32 %s28, 1
        %s148 = smul.addr %s147, 8
        %s149 = scalar_lea.vmem [#allocation2], %s148
        // Predicated region
        $region29: #{tpu_custom_call.1} parent=27 // pred_check
          %p150 = pneg %p41
        $region30: #{tpu_custom_call.1} parent=27 // pred_check_branch
          %152 = sbr.rel (%p150) target = $region32
        $region31: #{tpu_custom_call.1} parent=27 // pred_region
          %153 = dma.done %s146, 128
        $region32: #{tpu_custom_call.1} parent=27 // pred_fallthru
          _
        // Predicated region
        $region33: #{tpu_custom_call.1} parent=27 // pred_check
          %p154 = pneg %p62
        $region34: #{tpu_custom_call.1} parent=27 // pred_check_branch
          %156 = sbr.rel (%p154) target = $region36
        $region35: #{tpu_custom_call.1} parent=27 // pred_region
          %157 = dma.done [#allocation6], 4096
        $region36: #{tpu_custom_call.1} parent=27 // pred_fallthru
          _
        %s158 = sand.u32 %s28, 1
        %s159 = scalar_lea.sflag [#allocation3], %s158
        %s160 = sand.u32 %s28, 1
        %s161 = smul.addr %s160, 8
        %s162 = scalar_lea.vmem [#allocation2], %s161
        %p163 = pneg %p41
        %p164 = pneg %p38
        %p165 = pneg %p62
        %p166 = pneg %p59
        %p167 = pneg %p88
        %p168 = pneg %p85
        %s169 = sand.u32 %s75, 1
        %s170 = scalar_lea.sflag [#allocation4], %s169
        %s171 = sand.u32 %s75, 1
        %s172 = smul.addr %s171, 16
        %s173 = scalar_lea.vmem [#allocation7], %s172
        %v174 = vld [vmem:[%s149] sm:$0xff]
        %v175 = vld [vmem:[#allocation5] sm:$0xff]
        %v176 = vld [vmem:[#allocation5 + $0x8] sm:$0xff]
        %v177 = vld [vmem:[#allocation5 + $0x10] sm:$0xff]
        %v178 = vld [vmem:[#allocation5 + $0x18] sm:$0xff]
        %v179 = vld [vmem:[#allocation5 + $0x20] sm:$0xff]
        %v180 = vld [vmem:[#allocation5 + $0x28] sm:$0xff]
        %v181 = vld [vmem:[#allocation5 + $0x30] sm:$0xff]
        %v182 = vld [vmem:[#allocation5 + $0x38] sm:$0xff]
        %v183 = vld [vmem:[#allocation5 + $0x40] sm:$0xff]
        %v184 = vld [vmem:[#allocation5 + $0x48] sm:$0xff]
        %v185 = vld [vmem:[#allocation5 + $0x50] sm:$0xff]
        %v186 = vld [vmem:[#allocation5 + $0x58] sm:$0xff]
        %v187 = vld [vmem:[#allocation5 + $0x60] sm:$0xff]
        %v188 = vld [vmem:[#allocation5 + $0x68] sm:$0xff]
        %v189 = vld [vmem:[#allocation5 + $0x70] sm:$0xff]
        %v190 = vld [vmem:[#allocation5 + $0x78] sm:$0xff]
        %v191 = vld [vmem:[#allocation5 + $0x80] sm:$0xff]
        %v192 = vld [vmem:[#allocation5 + $0x88] sm:$0xff]
        %v193 = vld [vmem:[#allocation5 + $0x90] sm:$0xff]
        %v194 = vld [vmem:[#allocation5 + $0x98] sm:$0xff]
        %v195 = vld [vmem:[#allocation5 + $0xa0] sm:$0xff]
        %v196 = vld [vmem:[#allocation5 + $0xa8] sm:$0xff]
        %v197 = vld [vmem:[#allocation5 + $0xb0] sm:$0xff]
        %v198 = vld [vmem:[#allocation5 + $0xb8] sm:$0xff]
        %v199 = vld [vmem:[#allocation5 + $0xc0] sm:$0xff]
        %v200 = vld [vmem:[#allocation5 + $0xc8] sm:$0xff]
        %v201 = vld [vmem:[#allocation5 + $0xd0] sm:$0xff]
        %v202 = vld [vmem:[#allocation5 + $0xd8] sm:$0xff]
        %v203 = vld [vmem:[#allocation5 + $0xe0] sm:$0xff]
        %v204 = vld [vmem:[#allocation5 + $0xe8] sm:$0xff]
        %v205 = vld [vmem:[#allocation5 + $0xf0] sm:$0xff]
        %v206 = vld [vmem:[#allocation5 + $0xf8] sm:$0xff]
        %207 = vmatprep.subr.mxu0 %v206
        %208 = vmatpush1.msra.mxu0 %v205
        %209 = vmatprep.subr.mxu0 %v204
        %210 = vmatpush1.msra.mxu0 %v203
        %211 = vmatprep.subr.mxu0 %v202
        %212 = vmatpush1.msra.mxu0 %v201
        %213 = vmatprep.subr.mxu0 %v200
        %214 = vmatpush1.msra.mxu0 %v199
        %215 = vmatprep.subr.mxu0 %v198
        %216 = vmatpush1.msra.mxu0 %v197
        %217 = vmatprep.subr.mxu0 %v196
        %218 = vmatpush1.msra.mxu0 %v195
        %219 = vmatprep.subr.mxu0 %v194
        %220 = vmatpush1.msra.mxu0 %v193
        %221 = vmatprep.subr.mxu0 %v192
        %222 = vmatpush1.msra.mxu0 %v191
        %223 = vmatprep.subr.mxu0 %v190
        %224 = vmatpush1.msra.mxu0 %v189
        %225 = vmatprep.subr.mxu0 %v188
        %226 = vmatpush1.msra.mxu0 %v187
        %227 = vmatprep.subr.mxu0 %v186
        %228 = vmatpush1.msra.mxu0 %v185
        %229 = vmatprep.subr.mxu0 %v184
        %230 = vmatpush1.msra.mxu0 %v183
        %231 = vmatprep.subr.mxu0 %v182
        %232 = vmatpush1.msra.mxu0 %v181
        %233 = vmatprep.subr.mxu0 %v180
        %234 = vmatpush1.msra.mxu0 %v179
        %235 = vmatprep.subr.mxu0 %v178
        %236 = vmatpush1.msra.mxu0 %v177
        %237 = vmatprep.subr.mxu0 %v176
        %238 = vmatpush1.msra.mxu0 %v175
        %239 = vmatprep.subr.mxu0 0.0
        %240 = vmatpush2.msra.mxu0 0.0
        %241 = vmatprep.subr.mxu0 0.0
        %242 = vmatpush2.msra.mxu0 0.0
        %243 = vmatprep.subr.mxu0 0.0
        %244 = vmatpush2.msra.mxu0 0.0
        %245 = vmatprep.subr.mxu0 0.0
        %246 = vmatpush2.msra.mxu0 0.0
        %247 = vmatprep.subr.mxu0 0.0
        %248 = vmatpush2.msra.mxu0 0.0
        %249 = vmatprep.subr.mxu0 0.0
        %250 = vmatpush2.msra.mxu0 0.0
        %251 = vmatprep.subr.mxu0 0.0
        %252 = vmatpush2.msra.mxu0 0.0
        %253 = vmatprep.subr.mxu0 0.0
        %254 = vmatpush2.msra.mxu0 0.0
        %255 = vmatprep.subr.mxu0 0.0
        %256 = vmatpush2.msra.mxu0 0.0
        %257 = vmatprep.subr.mxu0 0.0
        %258 = vmatpush2.msra.mxu0 0.0
        %259 = vmatprep.subr.mxu0 0.0
        %260 = vmatpush2.msra.mxu0 0.0
        %261 = vmatprep.subr.mxu0 0.0
        %262 = vmatpush2.msra.mxu0 0.0
        %263 = vmatprep.subr.mxu0 0.0
        %264 = vmatpush2.msra.mxu0 0.0
        %265 = vmatprep.subr.mxu0 0.0
        %266 = vmatpush2.msra.mxu0 0.0
        %267 = vmatprep.subr.mxu0 0.0
        %268 = vmatpush2.msra.mxu0 0.0
        %269 = vmatprep.subr.mxu0 0.0
        %270 = vmatpush2.msra.mxu0 0.0
        %271 = vmatprep.mubr.f32.mxu0 0.0
        %272 = vmatmul.mubr.f32.gmra.mxu0 %v174
        %v273 = vpop.f32.mrf.mxu0
        %v274 = vadd.f32 0.0, %v273
        %v275 = vpop.f32.mrf.mxu0
        %v276 = vadd.f32 0.0, %v275
        %277 = vdwg.mxu0
        %278 = vst [vmem:[%s173] sm:$0xff] %v274
        %279 = vst [vmem:[%s173 + $0x8] sm:$0xff] %v276
        %s280 = sand.u32 %s75, 1
        %s281 = scalar_lea.sflag [#allocation4], %s280
        %s282 = sand.u32 %s75, 1
        %s283 = smul.addr %s282, 16
        %s284 = scalar_lea.vmem [#allocation7], %s283
        // Predicated region
        $region37: #{tpu_custom_call.1} parent=27 // pred_check
          %p285 = pneg %p85
        $region38: #{tpu_custom_call.1} parent=27 // pred_check_branch
          %287 = sbr.rel (%p285) target = $region40
        $region39: #{tpu_custom_call.1} parent=27 // pred_region
          %s289 = ssub.s32 256, 256
          %290 = vsyncadd %s281, %s289
          %s291 = smul.addr %s20, 2
          %s292 = smul.addr %s291, 128
          %s293 = scalar_lea.hbm %s2, %s292
          %s295 = sshll.u32 %s284, 4
          %s296 = int_to_ptr.vmem [resolvable:$true] %s295
          %298 = dma.vmem_to_hbm [thread:$0]  %s296, 256, %s293, %s281
        $region40: #{tpu_custom_call.1} parent=27 // pred_fallthru
          _
      $region28: #{tpu_custom_call.1} parent=5 // pred_fallthru
        _
      %p299 = scmp.le.s32.totalorder 2, %s15
      // Predicated region
      $region41: #{tpu_custom_call.1} parent=5 // pred_check
        %p300 = pneg %p299
      $region42: #{tpu_custom_call.1} parent=5 // pred_check_branch
        %302 = sbr.rel (%p300) target = $region44
      $region43: #{tpu_custom_call.1} parent=5 // pred_region
        %s303 = ssub.s32 %s15, 2
        // Predicated region
        $region45: #{tpu_custom_call.1} parent=43 // pred_check
          %p304 = pneg %p91
        $region46: #{tpu_custom_call.1} parent=43 // pred_check_branch
          %306 = sbr.rel (%p304) target = $region48
        $region47: #{tpu_custom_call.1} parent=43 // pred_region
          %s307 = sand.u32 %s76, 1
          %s308 = scalar_lea.sflag [#allocation4], %s307
          %s309 = sand.u32 %s76, 1
          %s310 = smul.addr %s309, 16
          %s311 = scalar_lea.vmem [#allocation7], %s310
          %312 = dma.done %s308, 256
        $region48: #{tpu_custom_call.1} parent=43 // pred_fallthru
          _
      $region44: #{tpu_custom_call.1} parent=5 // pred_fallthru
        _
    $region6: #{tpu_custom_call.1} parent=1 // loop_footer
      %s19 = sadd.s32 1, %s15
    $region7: #{tpu_custom_call.1} parent=1 // loop_footer_branch
      %14 = sbr.rel target = $region3
    $region8: #{tpu_custom_call.1} parent=1 // loop_exit
      _
    %313 = vsyncpa [#allocation3], 1
    %s314 = scalar_lea.sflag [#allocation3], 1
    %315 = vsyncpa %s314, 1
    %316 = vsyncpa [#allocation6], 1
    %317 = vsyncpa [#allocation4], 1
    %s318 = scalar_lea.sflag [#allocation4], 1
    %319 = vsyncpa %s318, 1

</llo_original>
